<compile_context>
chip_gen: v5e
topology: v5e:2x2
jax: 0.10.0
libtpu: 0.0.40
codegen_flags: <defaults>
</compile_context>

<pallas_src>
import jax
import jax.numpy as jnp
from jax.experimental import pallas as pl
from jax.experimental.pallas import tpu as pltpu

_LANES = 128
_SUBLANE = 8
# ~3 MiB per block -> 2 in-bufs + 2 out-bufs = ~12 MiB, under every
# generation's default scoped-VMEM budget (v5e 16 MiB, v6e/v7x 32 MiB).
_TARGET_BLOCK_BYTES = 3 * 1024 * 1024
# Keep at least this many grid steps (when the array is big enough) so the
# "parallel" grid axis can be sharded across both TensorCores on v7x.
_MIN_GRID_STEPS = 8


# ---------------------------------------------------------------------------
# Pallas kernel: elementwise Swish  y = x * sigmoid(x)
# ---------------------------------------------------------------------------
def _swish_kernel(x_ref, o_ref):
    # Upcast in-kernel (HBM traffic stays in the input dtype, e.g. bf16).
    x = x_ref[...].astype(jnp.float32)
    # Numerically stable sigmoid:
    #   x >= 0: 1 / (1 + exp(-x))        x < 0: exp(x) / (1 + exp(x))
    # exp() goes to the EUP slot; the rest is a handful of VPU ops.  This
    # kernel is HBM-bandwidth-bound so compute is free filler.
    e = jnp.exp(-jnp.abs(x))
    sig = jnp.where(x >= 0, 1.0, e) / (1.0 + e)
    o_ref[...] = (x * sig).astype(o_ref.dtype)


def _round_up(v, m):
    return ((v + m - 1) // m) * m


def _swish_pallas_2d(x2d):
    """x2d: (rows, 128) array, any dtype. Returns same shape/dtype."""
    rows, lanes = x2d.shape
    assert lanes == _LANES

    rows8 = _round_up(rows, _SUBLANE)
    itemsize = jnp.dtype(x2d.dtype).itemsize
    # Dtype-aware byte target: same HBM bytes per grid step for f32 and bf16.
    byte_rows = max(
        _SUBLANE,
        (_TARGET_BLOCK_BYTES // (lanes * itemsize)) // _SUBLANE * _SUBLANE,
    )
    # Keep >= _MIN_GRID_STEPS steps (when possible) so v7x megacore can split
    # the grid axis across both TensorCores.
    steps_rows = max(_SUBLANE, _round_up(pl.cdiv(rows, _MIN_GRID_STEPS), _SUBLANE))
    tile_r = max(_SUBLANE, min(byte_rows, steps_rows, rows8))

    grid = (pl.cdiv(rows, tile_r),)  # partial last block is masked by Pallas
    return pl.pallas_call(
        _swish_kernel,
        out_shape=jax.ShapeDtypeStruct((rows, lanes), x2d.dtype),
        grid_spec=pltpu.PrefetchScalarGridSpec(
            num_scalar_prefetch=0,
            grid=grid,
            in_specs=[pl.BlockSpec((tile_r, lanes), lambda i: (i, 0))],
            out_specs=pl.BlockSpec((tile_r, lanes), lambda i: (i, 0)),
        ),
        compiler_params=pltpu.CompilerParams(
            dimension_semantics=("parallel",)),
    )(x2d)


def _swish_plain(x):
    # Plain-JAX path for tiny (<128-element) pieces; not worth a kernel.
    return x * jax.nn.sigmoid(x)


def swish_pallas(x):
    """Elementwise Swish on an arbitrarily-shaped array via the Pallas kernel."""
    orig_shape = x.shape
    n = x.size
    if n == 0:
        return x
    flat = x.reshape(-1)
    rem = n % _LANES
    n_main = n - rem
    if rem == 0:
        # Common case (typical NN activation sizes): zero-copy reshape view,
        # no pad, no slice.
        y = _swish_pallas_2d(flat.reshape(-1, _LANES)).reshape(-1)
    elif n_main == 0:
        # Entire array is smaller than one lane row.
        y = _swish_plain(flat)
    else:
        # Ragged tail: kernel on the 128-aligned prefix, plain JAX on the
        # (<128-element) tail.  One concatenate instead of pad + slice
        # (which each cost a full HBM pass).
        main = _swish_pallas_2d(flat[:n_main].reshape(-1, _LANES)).reshape(-1)
        tail = _swish_plain(flat[n_main:])
        y = jnp.concatenate([main, tail])
    return y.reshape(orig_shape)


# ---------------------------------------------------------------------------
# The Expression module (JAX equivalent of the PyTorch nn.Module wrapper)
# ---------------------------------------------------------------------------
class Expression:
    """Mirrors augerino_utils.Expression: forward(*x, **y) = func(*x, **y)."""

    def __init__(self, func):
        self.func = func

    def __call__(self, *x, **y):
        return self.func(*x, **y)


if __name__ == "__main__":
    key = jax.random.PRNGKey(0)

    # Expression wrapping a Pallas-backed Swish (canonical augerino usage).
    module = Expression(swish_pallas)

    # Main check: NCHW input, small shape, size divisible by 128 (fast path).
    x = jax.random.normal(key, (2, 4, 16, 16), dtype=jnp.float32)
    out = jax.block_until_ready(module(x))
    ref = x * jax.nn.sigmoid(x)
    assert out.shape == x.shape and out.dtype == x.dtype
    assert jnp.max(jnp.abs(out - ref)) < 1e-5

    # Ragged-size check (size % 128 != 0 -> prefix-kernel + plain-JAX tail).
    k2 = jax.random.PRNGKey(1)
    xr = jax.random.normal(k2, (2, 4, 17, 17), dtype=jnp.float32)
    outr = jax.block_until_ready(module(xr))
    refr = xr * jax.nn.sigmoid(xr)
    assert outr.shape == xr.shape and outr.dtype == xr.dtype
    assert jnp.max(jnp.abs(outr - refr)) < 1e-5

    # bf16 check (dtype-preserving I/O, f32 compute in-kernel).
    xb = jax.random.normal(k2, (2, 4, 16, 16), dtype=jnp.bfloat16)
    outb = jax.block_until_ready(module(xb))
    refb = (xb.astype(jnp.float32) * jax.nn.sigmoid(xb.astype(jnp.float32)))
    assert outb.dtype == jnp.bfloat16
    assert jnp.max(jnp.abs(outb.astype(jnp.float32) - refb)) < 1e-2

    print("KERNEL_OK")
</pallas_src>

<mosaic_0001>
module attributes {stable_mosaic.version = 11 : i64} {
  func.func @_swish_kernel(%arg0: i32, %arg1: memref<8x128xf32, #tpu.memory_space<vmem>>, %arg2: memref<8x128xf32, #tpu.memory_space<vmem>>) attributes {dimension_semantics = [#tpu.dimension_semantics<parallel>], iteration_bounds = array<i64: 2>, scalar_prefetch = 0 : i64, scratch_operands = 0 : i64, tpu.core_type = #tpu.core_type<tc>, window_params = [{transform_indices = @transform_0, window_bounds = array<i64: 8, 128>}, {transform_indices = @transform_1, window_bounds = array<i64: 8, 128>}]} {
    %c0 = arith.constant 0 : index
    %c0_0 = arith.constant 0 : index
    %0 = vector.load %arg1[%c0, %c0_0] : memref<8x128xf32, #tpu.memory_space<vmem>>, vector<8x128xf32>
    %1 = math.absf %0 : vector<8x128xf32>
    %cst = arith.constant 0.000000e+00 : f32
    %2 = vector.broadcast %cst : f32 to vector<8x128xf32>
    %3 = arith.subf %2, %1 : vector<8x128xf32>
    %4 = math.exp %3 : vector<8x128xf32>
    %cst_1 = arith.constant 0.000000e+00 : f32
    %5 = vector.broadcast %cst_1 : f32 to vector<8x128xf32>
    %6 = arith.cmpf oge, %0, %5 : vector<8x128xf32>
    %cst_2 = arith.constant 1.000000e+00 : f32
    %7 = vector.broadcast %cst_2 : f32 to vector<8x128xf32>
    %8 = arith.select %6, %7, %4 : vector<8x128xi1>, vector<8x128xf32>
    %cst_3 = arith.constant 1.000000e+00 : f32
    %9 = vector.broadcast %cst_3 : f32 to vector<8x128xf32>
    %10 = arith.addf %9, %4 : vector<8x128xf32>
    %11 = arith.divf %8, %10 : vector<8x128xf32>
    %12 = arith.mulf %0, %11 : vector<8x128xf32>
    %c0_4 = arith.constant 0 : index
    %c0_5 = arith.constant 0 : index
    %13 = vector.load %arg2[%c0_4, %c0_5] : memref<8x128xf32, #tpu.memory_space<vmem>>, vector<8x128xf32>
    tpu.vector_store %arg2[%c0_4, %c0_5], %12 {strides = array<i32>} : memref<8x128xf32, #tpu.memory_space<vmem>>, vector<8x128xf32>,
    return
  }
  func.func @transform_0(%arg0: i32) -> (i32, i32) {
    %c0_i32 = arith.constant 0 : i32
    %c0_i32_0 = arith.constant 0 : i32
    return %arg0, %c0_i32 : i32, i32
  }
  func.func @transform_1(%arg0: i32) -> (i32, i32) {
    %c0_i32 = arith.constant 0 : i32
    %c0_i32_0 = arith.constant 0 : i32
    return %arg0, %c0_i32 : i32, i32
  }
}

</mosaic_0001>

<llo_original>
// kernel: tpu_custom_call.1
$region0: #{tpu_custom_call.1}
  #allocation0 [shape = 'u32[]', space=smem, size = 0x4, offset = 0x4, fixed_abs, tag = 'smem constant byte address 0x4 - core index']
  #allocation1 [shape = 'u32[72,128]{1,0:T(1,128)}', space=vmem, size = 0x9000, scoped, tag = 'internal scratch']
  %s0 = inlined_call_operand.hbm [shape: f32[16,128], index: 0, kind: input, shape index: {}]
  %s1 = inlined_call_operand.hbm [shape: f32[16,128], index: 1, kind: output, shape index: {}]
  %s2 = sld [smem:[#allocation0]]
  $region41: #{tpu_custom_call.1} parent=0
    _
  %s4 = ssub.s32 1, %s2
  %s5 = scalar_select 0, %s4, %s2
  $region1: #{tpu_custom_call.1} parent=0
    #allocation2 [shape = 'u8[8192]{0}', space=vmem, size = 0x2000, scoped, tag = 'input window, operand 0']
    #allocation3 [shape = 's32[2]{0}', space=sflag, size = 0x8, scoped, tag = 'scoped memory for tpu_custom_call.1']
    #allocation4 [shape = 's32[2]{0}', space=sflag, size = 0x8, scoped, tag = 'scoped memory for tpu_custom_call.1']
    #allocation5 [shape = 'u8[8192]{0}', space=vmem, size = 0x2000, scoped, tag = 'output window, operand 0']
    %6 = vsyncpa [#allocation3], 0
    %s7 = scalar_lea.sflag [#allocation3], 1
    %8 = vsyncpa %s7, 0
    %9 = vsyncpa [#allocation4], 0
    %s10 = scalar_lea.sflag [#allocation4], 1
    %11 = vsyncpa %s10, 0
    loop: start=0, step=1, limit=4
    $region2: #{tpu_custom_call.1} parent=1 // loop_pre_header
      _
    $region3: #{tpu_custom_call.1} parent=1 // loop_header
      %s13 = sphi 0, %s17
      %p14 = scmp.ge.s32.totalorder %s13, 4
      %s23 = sphi 0, %s25
      %s26 = sphi 0, %s23
      %s27 = sphi 0, %s26
      %s43 = sphi 0, %s27
      %s49 = sphi 0, %s51
      %s52 = sphi 0, %s49
      %s53 = sphi 0, %s52
      %s69 = sphi 0, %s53
    $region4: #{tpu_custom_call.1} parent=1 // loop_header_branch
      %16 = sbr.rel (%p14) target = $region8
    $region5: #{tpu_custom_call.1} parent=1 // loop_body
      %s18 = ssub.s32 %s13, 1
      %s19 = ssub.s32 %s13, 2
      %s20 = sadd.s32 %s13, 1
      %s21 = ssub.s32 %s13, %s20
      %p22 = scmp.eq.s32.totalorder %s21, 0
      %s24 = sadd.s32 %s23, 1
      %s25 = scalar_select %p22, %s23, %s24
      %p28 = pneg %p22
      %p29 = scmp.eq.s32.totalorder %s13, 1
      %p30 = por %p28, %p29
      %p31 = scmp.ne.s32.totalorder %s23, %s26
      %p32 = scmp.eq.s32.totalorder %s13, 0
      %p33 = por %p31, %p32
      %p34 = scmp.ne.s32.totalorder %s23, %s26
      %p35 = scmp.eq.s32.totalorder %s18, 1
      %p36 = por %p34, %p35
      %p37 = scmp.ne.s32.totalorder %s26, %s27
      %p38 = scmp.eq.s32.totalorder %s18, 0
      %p39 = por %p37, %p38
      %p40 = scmp.ne.s32.totalorder %s26, %s27
      %p41 = scmp.eq.s32.totalorder %s19, 1
      %p42 = por %p40, %p41
      %p44 = scmp.ne.s32.totalorder %s27, %s43
      %p45 = scmp.eq.s32.totalorder %s19, 0
      %p46 = por %p44, %p45
      %s47 = ssub.s32 %s13, %s20
      %p48 = scmp.eq.s32.totalorder %s47, 0
      %s50 = sadd.s32 %s49, 1
      %s51 = scalar_select %p48, %s49, %s50
      %p54 = pneg %p48
      %p55 = scmp.eq.s32.totalorder %s13, 1
      %p56 = por %p54, %p55
      %p57 = scmp.ne.s32.totalorder %s49, %s52
      %p58 = scmp.eq.s32.totalorder %s13, 0
      %p59 = por %p57, %p58
      %p60 = scmp.ne.s32.totalorder %s49, %s52
      %p61 = scmp.eq.s32.totalorder %s18, 1
      %p62 = por %p60, %p61
      %p63 = scmp.ne.s32.totalorder %s52, %s53
      %p64 = scmp.eq.s32.totalorder %s18, 0
      %p65 = por %p63, %p64
      %p66 = scmp.ne.s32.totalorder %s52, %s53
      %p67 = scmp.eq.s32.totalorder %s19, 1
      %p68 = por %p66, %p67
      %p70 = scmp.ne.s32.totalorder %s53, %s69
      %p71 = scmp.eq.s32.totalorder %s19, 0
      %p72 = por %p70, %p71
      %p73 = scmp.le.s32.totalorder 1, %s13
      %p74 = scmp.lt.s32.totalorder %s13, 3
      %p75 = pnand %p73, %p74
      %p76 = pneg %p75
      // Predicated region
      $region9: #{tpu_custom_call.1} parent=5 // pred_check
        _
      $region10: #{tpu_custom_call.1} parent=5 // pred_check_branch
        %78 = sbr.rel (%p75) target = $region12
      $region11: #{tpu_custom_call.1} parent=5 // pred_region
        %s79 = ssub.s32 %s13, 1
      $region12: #{tpu_custom_call.1} parent=5 // pred_fallthru
        _
      %p80 = scmp.lt.s32.totalorder %s13, 2
      // Predicated region
      $region13: #{tpu_custom_call.1} parent=5 // pred_check
        %p81 = pneg %p80
      $region14: #{tpu_custom_call.1} parent=5 // pred_check_branch
        %83 = sbr.rel (%p81) target = $region16
      $region15: #{tpu_custom_call.1} parent=5 // pred_region
        // Predicated region
        $region17: #{tpu_custom_call.1} parent=15 // pred_check
          %p84 = pneg %p33
        $region18: #{tpu_custom_call.1} parent=15 // pred_check_branch
          %86 = sbr.rel (%p84) target = $region20
        $region19: #{tpu_custom_call.1} parent=15 // pred_region
          %s87 = sand.u32 %s23, 1
          %s88 = scalar_lea.sflag [#allocation3], %s87
          %s89 = sand.u32 %s23, 1
          %s90 = smul.addr %s89, 8
          %s91 = scalar_lea.vmem [#allocation2], %s90
          %93 = vsyncadd %s88, 0
          %s94 = smul.addr %s13, 8
          %s95 = scalar_lea.hbm %s0, %s94
          %s97 = sshll.u32 %s95, 4
          %s98 = int_to_ptr.hbm [resolvable:$true] %s97
          %s99 = sshll.u32 %s91, 4
          %s100 = int_to_ptr.vmem [resolvable:$true] %s99
          %102 = dma.hbm_to_vmem [thread:$0]  %s98, 128, %s100, %s88
        $region20: #{tpu_custom_call.1} parent=15 // pred_fallthru
          _
      $region16: #{tpu_custom_call.1} parent=5 // pred_fallthru
        _
      %p103 = scmp.le.s32.totalorder 1, %s13
      %p104 = scmp.lt.s32.totalorder %s13, 3
      %p105 = pnand %p103, %p104
      %p106 = pneg %p105
      // Predicated region
      $region21: #{tpu_custom_call.1} parent=5 // pred_check
        _
      $region22: #{tpu_custom_call.1} parent=5 // pred_check_branch
        %108 = sbr.rel (%p105) target = $region24
      $region23: #{tpu_custom_call.1} parent=5 // pred_region
        %s109 = ssub.s32 %s13, 1
        %s110 = sand.u32 %s26, 1
        %s111 = scalar_lea.sflag [#allocation3], %s110
        %s112 = sand.u32 %s26, 1
        %s113 = smul.addr %s112, 8
        %s114 = scalar_lea.vmem [#allocation2], %s113
        // Predicated region
        $region25: #{tpu_custom_call.1} parent=23 // pred_check
          %p115 = pneg %p39
        $region26: #{tpu_custom_call.1} parent=23 // pred_check_branch
          %117 = sbr.rel (%p115) target = $region28
        $region27: #{tpu_custom_call.1} parent=23 // pred_region
          %119 = dma.done %s111, 128
        $region28: #{tpu_custom_call.1} parent=23 // pred_fallthru
          _
        %s120 = sand.u32 %s26, 1
        %s121 = scalar_lea.sflag [#allocation3], %s120
        %s122 = sand.u32 %s26, 1
        %s123 = smul.addr %s122, 8
        %s124 = scalar_lea.vmem [#allocation2], %s123
        %p125 = pneg %p39
        %p126 = pneg %p36
        %p127 = pneg %p65
        %p128 = pneg %p62
        %s129 = sand.u32 %s52, 1
        %s130 = scalar_lea.sflag [#allocation4], %s129
        %s131 = sand.u32 %s52, 1
        %s132 = smul.addr %s131, 8
        %s133 = scalar_lea.vmem [#allocation5], %s132
        %v134 = vld [vmem:[%s114] sm:$0xff]
        %v135 = vand.u32 2147483647, %v134
        %v136 = vsub.f32 0.0, %v135
        %v137 = vmul.f32 %v136, 1.442695
        %v138 = vpow.pop %v137
        %vm139 = vcmp.ge.f32.partialorder %v134, 0.0
        %v140 = vsel %vm139, 1.0, %v138
        %v141 = vadd.f32 %v138, 1.0
        %v142 = vrcp.pop %v141
        %v143 = vmul.f32 %v141, %v142
        %v144 = vsub.f32 1.0, %v143
        %v145 = vmul.f32 %v142, %v144
        %v146 = vadd.f32 %v142, %v145
        %vm147 = vweird.f32 %v141
        %vm148 = vweird.f32 %v142
        %vm149 = vmor %vm147, %vm148
        %v150 = vsel %vm149, %v142, %v146
        %v151 = vand.u32 2147483647, %v141
        %vm152 = vcmp.eq.f32.partialorder %v151, 8.507059e+37
        %v153 = vand.u32 %v141, 2147483648
        %v154 = vor.u32 1.1754944e-38, %v153
        %v155 = vsel %vm152, %v154, %v150
        %v156 = vmul.f32 %v140, %v155
        %v157 = vmul.f32 %v134, %v156
        %158 = vst [vmem:[%s133] sm:$0xff] %v157
        %s159 = sand.u32 %s52, 1
        %s160 = scalar_lea.sflag [#allocation4], %s159
        %s161 = sand.u32 %s52, 1
        %s162 = smul.addr %s161, 8
        %s163 = scalar_lea.vmem [#allocation5], %s162
        // Predicated region
        $region29: #{tpu_custom_call.1} parent=23 // pred_check
          %p164 = pneg %p62
        $region30: #{tpu_custom_call.1} parent=23 // pred_check_branch
          %166 = sbr.rel (%p164) target = $region32
        $region31: #{tpu_custom_call.1} parent=23 // pred_region
          %168 = vsyncadd %s160, 0
          %s169 = smul.addr %s18, 8
          %s170 = scalar_lea.hbm %s1, %s169
          %s172 = sshll.u32 %s163, 4
          %s173 = int_to_ptr.vmem [resolvable:$true] %s172
          %s174 = sshll.u32 %s170, 4
          %s175 = int_to_ptr.hbm [resolvable:$true] %s174
          %177 = dma.vmem_to_hbm [thread:$0]  %s173, 128, %s175, %s160
        $region32: #{tpu_custom_call.1} parent=23 // pred_fallthru
          _
      $region24: #{tpu_custom_call.1} parent=5 // pred_fallthru
        _
      %p178 = scmp.le.s32.totalorder 2, %s13
      // Predicated region
      $region33: #{tpu_custom_call.1} parent=5 // pred_check
        %p179 = pneg %p178
      $region34: #{tpu_custom_call.1} parent=5 // pred_check_branch
        %181 = sbr.rel (%p179) target = $region36
      $region35: #{tpu_custom_call.1} parent=5 // pred_region
        %s182 = ssub.s32 %s13, 2
        // Predicated region
        $region37: #{tpu_custom_call.1} parent=35 // pred_check
          %p183 = pneg %p68
        $region38: #{tpu_custom_call.1} parent=35 // pred_check_branch
          %185 = sbr.rel (%p183) target = $region40
        $region39: #{tpu_custom_call.1} parent=35 // pred_region
          %s186 = sand.u32 %s53, 1
          %s187 = scalar_lea.sflag [#allocation4], %s186
          %s188 = sand.u32 %s53, 1
          %s189 = smul.addr %s188, 8
          %s190 = scalar_lea.vmem [#allocation5], %s189
          %192 = dma.done %s187, 128
        $region40: #{tpu_custom_call.1} parent=35 // pred_fallthru
          _
      $region36: #{tpu_custom_call.1} parent=5 // pred_fallthru
        _
    $region6: #{tpu_custom_call.1} parent=1 // loop_footer
      %s17 = sadd.s32 1, %s13
    $region7: #{tpu_custom_call.1} parent=1 // loop_footer_branch
      %12 = sbr.rel target = $region3
    $region8: #{tpu_custom_call.1} parent=1 // loop_exit
      _
    %193 = vsyncpa [#allocation3], 1
    %s194 = scalar_lea.sflag [#allocation3], 1
    %195 = vsyncpa %s194, 1
    %196 = vsyncpa [#allocation4], 1
    %s197 = scalar_lea.sflag [#allocation4], 1
    %198 = vsyncpa %s197, 1

</llo_original>
